<compile_context>
chip_gen: v7x
topology: tpu7x:2x2x1
jax: 0.10.0
libtpu: 0.0.40
codegen_flags: <defaults>
</compile_context>

<pallas_src>
import functools

import jax
import jax.numpy as jnp
from jax import lax
from jax.experimental import pallas as pl
from jax.experimental.pallas import tpu as pltpu

EPS = 1e-5

_VMEM_LIMIT_BYTES = 48 * 1024 * 1024   # below v7x's 64 MiB physical VMEM
_TILE_BYTE_BUDGET = 24 * 1024 * 1024   # 2x input + 2x output streaming tiles
_FAST_PATH_BYTES = 28 * 1024 * 1024    # single-pass whole-tensor budget
_MAX_ROW_TILE = 8192
_MAX_PACK_LANES = 1024


def _cdiv(a, b):
    return -(-a // b)


def _sublane(itemsize):
    # native sublane granule: 8 for 4-byte, 16 for 2-byte, 32 for 1-byte dtypes
    return max(8, 32 // max(int(itemsize), 1))


def _fast_path_fits(shape, itemsize):
    nelem = 1
    for s in shape:
        nelem *= int(s)
    # 2x (in + out) buffers + ~3 fp32 temporaries per element.
    return nelem * (4 * int(itemsize) + 12) <= _FAST_PATH_BYTES


# --------------------------------------------------------------------------
# Single-pass VMEM-resident kernels (whole tensor in VMEM, 1R + 1W of HBM).
# --------------------------------------------------------------------------
def _single_pass_2d_kernel(x_ref, g_ref, b_ref, o_ref, *, inv_n):
    xf = x_ref[...].astype(jnp.float32)                        # (N, C)
    mean = jnp.sum(xf, axis=0, keepdims=True) * inv_n          # (1, C)
    d = xf - mean
    var = jnp.sum(d * d, axis=0, keepdims=True) * inv_n        # biased var
    scale = g_ref[...] * lax.rsqrt(var + EPS)
    o_ref[...] = (d * scale + b_ref[...]).astype(o_ref.dtype)


def _single_pass_3d_kernel(x_ref, g_ref, b_ref, o_ref, *, inv_n):
    xf = x_ref[...].astype(jnp.float32)                        # (N, C, L)
    s_l = jnp.sum(xf, axis=2, keepdims=True)                   # (N, C, 1)
    mean = jnp.sum(s_l, axis=0, keepdims=True) * inv_n         # (1, C, 1)
    d = xf - mean
    q_l = jnp.sum(d * d, axis=2, keepdims=True)
    var = jnp.sum(q_l, axis=0, keepdims=True) * inv_n
    scale = g_ref[...][None] * lax.rsqrt(var + EPS)            # (1, C, 1)
    o_ref[...] = (d * scale + b_ref[...][None]).astype(o_ref.dtype)


# --------------------------------------------------------------------------
# Streaming 2-D path: x viewed as (rows_eff, lanes); reduce over rows.
# Outputs are VMEM-resident accumulators (shift-centred sum / sumsq / offset).
# --------------------------------------------------------------------------
def _stats_rows_kernel(x_ref, s_ref, q_ref, off_ref, *,
                       valid_rows, tile_rows, ragged):
    i = pl.program_id(0)

    @pl.when(i == 0)
    def _():
        s_ref[...] = jnp.zeros_like(s_ref)
        q_ref[...] = jnp.zeros_like(q_ref)
        off_ref[...] = x_ref[0:1, :].astype(jnp.float32)       # per-lane offset

    xf = x_ref[...].astype(jnp.float32)                        # (TR, Cl)
    d = xf - off_ref[...]
    if ragged:
        row = lax.broadcasted_iota(jnp.int32, (tile_rows, 1), 0) + i * tile_rows
        d = jnp.where(row < valid_rows, d, 0.0)
    s_ref[...] += jnp.sum(d, axis=0, keepdims=True)
    q_ref[...] += jnp.sum(d * d, axis=0, keepdims=True)


def _norm_rows_kernel(x_ref, scale_ref, shift_ref, o_ref):
    y = x_ref[...].astype(jnp.float32) * scale_ref[...] + shift_ref[...]
    o_ref[...] = y.astype(o_ref.dtype)


def _pick_pack_factor(rows, c):
    """Fold k rows onto the lane axis so tiles stay lane-dense for small C."""
    if c >= 128:
        return 1
    max_k = min(rows, max(_MAX_PACK_LANES // c, 1))
    for k in range(max_k, 1, -1):
        if rows % k == 0 and (k * c) % 128 == 0:
            return k
    for k in range(max_k, 1, -1):
        if rows % k == 0 and k * c >= 128:
            return k
    return 1


def _choose_row_tile(rows_eff, lanes, itemsize, row_block):
    sub = _sublane(itemsize)
    if row_block is not None:
        tr = int(row_block)
    else:
        per_row = 4 * lanes * max(int(itemsize), 1)   # 2x in + 2x out buffers
        tr = min(_TILE_BYTE_BUDGET // max(per_row, 1), _MAX_ROW_TILE)
    tr = max(tr, sub)
    tr = (tr // sub) * sub
    if tr >= rows_eff:
        return rows_eff                               # full-extent block
    return tr


def _bn1d_2d(x, gamma, beta, row_block):
    rows, c = x.shape
    if rows <= 1:
        raise ValueError("Expected more than 1 value per channel in training mode")

    g2 = gamma.astype(jnp.float32).reshape(1, c)
    b2 = beta.astype(jnp.float32).reshape(1, c)

    # Fast path: whole tensor resident in VMEM, one launch.
    if row_block is None and _fast_path_fits(x.shape, x.dtype.itemsize):
        return pl.pallas_call(
            functools.partial(_single_pass_2d_kernel, inv_n=1.0 / rows),
            out_shape=jax.ShapeDtypeStruct((rows, c), x.dtype),
            grid=(1,),
            in_specs=[pl.BlockSpec((rows, c), lambda i: (0, 0)),
                      pl.BlockSpec((1, c), lambda i: (0, 0)),
                      pl.BlockSpec((1, c), lambda i: (0, 0))],
            out_specs=pl.BlockSpec((rows, c), lambda i: (0, 0)),
            compiler_params=pltpu.CompilerParams(
                dimension_semantics=("arbitrary",),
                vmem_limit_bytes=_VMEM_LIMIT_BYTES),
        )(x, g2, b2)

    # Streaming path: lane-pack small C, then two row-tiled passes.
    k = _pick_pack_factor(rows, c)
    cl = k * c
    rows_eff = rows // k
    xv = x.reshape(rows_eff, cl) if k > 1 else x

    tr = _choose_row_tile(rows_eff, cl, x.dtype.itemsize, row_block)
    num_tiles = _cdiv(rows_eff, tr)
    ragged = (rows_eff % tr) != 0

    tile_spec = pl.BlockSpec((tr, cl), lambda i: (i, 0))
    vec_spec = pl.BlockSpec((1, cl), lambda i: (0, 0))

    # Pass 1: shift-centred per-lane sums (masked ragged last tile).
    s, q, off = pl.pallas_call(
        functools.partial(_stats_rows_kernel, valid_rows=rows_eff,
                          tile_rows=tr, ragged=ragged),
        out_shape=(jax.ShapeDtypeStruct((1, cl), jnp.float32),
                   jax.ShapeDtypeStruct((1, cl), jnp.float32),
                   jax.ShapeDtypeStruct((1, cl), jnp.float32)),
        grid=(num_tiles,),
        in_specs=[tile_spec],
        out_specs=(vec_spec, vec_spec, vec_spec),
        compiler_params=pltpu.CompilerParams(
            dimension_semantics=("arbitrary",),
            vmem_limit_bytes=_VMEM_LIMIT_BYTES),
    )(xv)

    # Tiny per-channel finalize in XLA: pooled-variance merge over the k
    # lane replicas (exact and numerically stable; trivial for k == 1).
    nj = float(rows_eff)
    s2 = s.reshape(k, c)
    q2 = q.reshape(k, c)
    off2 = off.reshape(k, c)
    mean_j = off2 + s2 / nj
    m2_j = q2 - (s2 * s2) / nj
    mean = jnp.mean(mean_j, axis=0)
    m2 = jnp.sum(m2_j, axis=0) + nj * jnp.sum((mean_j - mean[None, :]) ** 2, axis=0)
    var = jnp.maximum(m2 / rows, 0.0)
    scale_c = gamma.astype(jnp.float32) * lax.rsqrt(var + EPS)
    shift_c = beta.astype(jnp.float32) - mean * scale_c
    scale_l = jnp.tile(scale_c, k).reshape(1, cl)
    shift_l = jnp.tile(shift_c, k).reshape(1, cl)

    # Pass 2: y = x * scale + shift; OOB rows of the last tile are dropped.
    out = pl.pallas_call(
        _norm_rows_kernel,
        out_shape=jax.ShapeDtypeStruct((rows_eff, cl), x.dtype),
        grid=(num_tiles,),
        in_specs=[tile_spec, vec_spec, vec_spec],
        out_specs=tile_spec,
        compiler_params=pltpu.CompilerParams(
            dimension_semantics=("parallel",),
            vmem_limit_bytes=_VMEM_LIMIT_BYTES),
    )(xv, scale_l, shift_l)

    return out.reshape(rows, c) if k > 1 else out


# --------------------------------------------------------------------------
# Streaming 3-D path: native (N, C, L) layout, L on lanes, C on sublanes.
# --------------------------------------------------------------------------
def _stats_3d_kernel(x_ref, g_ref, b_ref, scale_ref, shift_ref,
                     s_sc, q_sc, off_sc, *, n, l, tn, tl, inv_total):
    i = pl.program_id(0)
    j = pl.program_id(1)

    @pl.when((i == 0) & (j == 0))
    def _():
        s_sc[...] = jnp.zeros_like(s_sc)
        q_sc[...] = jnp.zeros_like(q_sc)
        off_sc[...] = x_ref[0, :, 0:1].astype(jnp.float32)     # (C, 1)

    xf = x_ref[...].astype(jnp.float32)                        # (TN, C, TL)
    d = xf - off_sc[...][None]
    ragged_n = (n % tn) != 0
    ragged_l = (l % tl) != 0
    if ragged_n or ragged_l:
        valid = None
        if ragged_n:
            ni = lax.broadcasted_iota(jnp.int32, (tn, 1, 1), 0) + i * tn
            valid = ni < n
        if ragged_l:
            li = lax.broadcasted_iota(jnp.int32, (1, 1, tl), 2) + j * tl
            lm = li < l
            valid = lm if valid is None else (valid & lm)
        d = jnp.where(valid, d, 0.0)
    # Pure VPU accumulation into lane-shaped scratch; lane reduce only at end.
    s_sc[...] += jnp.sum(d, axis=0)                            # (C, TL)
    q_sc[...] += jnp.sum(d * d, axis=0)

    @pl.when((i == pl.num_programs(0) - 1) & (j == pl.num_programs(1) - 1))
    def _():
        s = jnp.sum(s_sc[...], axis=1, keepdims=True)          # (C, 1)
        q = jnp.sum(q_sc[...], axis=1, keepdims=True)
        mean = off_sc[...] + s * inv_total
        var = jnp.maximum(q * inv_total - (s * inv_total) ** 2, 0.0)
        scale = g_ref[...] * lax.rsqrt(var + EPS)
        scale_ref[...] = scale
        shift_ref[...] = b_ref[...] - mean * scale


def _norm_3d_kernel(x_ref, scale_ref, shift_ref, o_ref):
    y = (x_ref[...].astype(jnp.float32) * scale_ref[...][None]
         + shift_ref[...][None])
    o_ref[...] = y.astype(o_ref.dtype)


def _bn1d_3d(x, gamma, beta, row_block):
    n, c, l = x.shape
    if n * l <= 1:
        raise ValueError("Expected more than 1 value per channel in training mode")

    g2 = gamma.astype(jnp.float32).reshape(c, 1)
    b2 = beta.astype(jnp.float32).reshape(c, 1)
    itemsize = max(int(x.dtype.itemsize), 1)

    # Fast path: whole tensor resident in VMEM.
    if row_block is None and _fast_path_fits(x.shape, itemsize):
        return pl.pallas_call(
            functools.partial(_single_pass_3d_kernel, inv_n=1.0 / (n * l)),
            out_shape=jax.ShapeDtypeStruct((n, c, l), x.dtype),
            grid=(1,),
            in_specs=[pl.BlockSpec((n, c, l), lambda i: (0, 0, 0)),
                      pl.BlockSpec((c, 1), lambda i: (0, 0)),
                      pl.BlockSpec((c, 1), lambda i: (0, 0))],
            out_specs=pl.BlockSpec((n, c, l), lambda i: (0, 0, 0)),
            compiler_params=pltpu.CompilerParams(
                dimension_semantics=("arbitrary",),
                vmem_limit_bytes=_VMEM_LIMIT_BYTES),
        )(x, g2, b2)

    # Streaming path.  Large L is tiled in 128-multiples (ragged tail masked)
    # instead of forcing a single full-extent L block that could blow VMEM.
    # TODO(synk): huge-N / tiny-L streaming inputs stay lane-sparse here; a
    # (N, C*L) lane-flattened variant with a grouped fold is not implemented.
    if l <= 256:
        tl = l
    else:
        by_budget = (_TILE_BYTE_BUDGET // (4 * c * itemsize)) // 128 * 128
        tl = max(128, min(by_budget, (l // 128) * 128, 2048))
    num_l = _cdiv(l, tl)

    if row_block is not None:
        tn = max(1, min(int(row_block), n))
    else:
        per_n = 4 * c * tl * itemsize                # 2x in + 2x out buffers
        tn = max(1, min(_TILE_BYTE_BUDGET // per_n, n))
    num_n = _cdiv(n, tn)

    tile_spec = pl.BlockSpec((tn, c, tl), lambda i, j: (i, 0, j))
    vec_spec = pl.BlockSpec((c, 1), lambda i, j: (0, 0))

    scale, shift = pl.pallas_call(
        functools.partial(_stats_3d_kernel, n=n, l=l, tn=tn, tl=tl,
                          inv_total=1.0 / (n * l)),
        out_shape=(jax.ShapeDtypeStruct((c, 1), jnp.float32),
                   jax.ShapeDtypeStruct((c, 1), jnp.float32)),
        grid=(num_n, num_l),
        in_specs=[tile_spec, vec_spec, vec_spec],
        out_specs=(vec_spec, vec_spec),
        scratch_shapes=[pltpu.VMEM((c, tl), jnp.float32),
                        pltpu.VMEM((c, tl), jnp.float32),
                        pltpu.VMEM((c, 1), jnp.float32)],
        compiler_params=pltpu.CompilerParams(
            dimension_semantics=("arbitrary", "arbitrary"),
            vmem_limit_bytes=_VMEM_LIMIT_BYTES),
    )(x, g2, b2)

    return pl.pallas_call(
        _norm_3d_kernel,
        out_shape=jax.ShapeDtypeStruct((n, c, l), x.dtype),
        grid=(num_n, num_l),
        in_specs=[tile_spec, vec_spec, vec_spec],
        out_specs=tile_spec,
        compiler_params=pltpu.CompilerParams(
            dimension_semantics=("parallel", "parallel"),
            vmem_limit_bytes=_VMEM_LIMIT_BYTES),
    )(x, scale, shift)


def batchnorm1d_train(x, gamma, beta, *, row_block=None):
    """torch.nn.BatchNorm1d(training=True) forward. x: (N, C) or (N, C, L)."""
    if x.ndim == 2:
        return _bn1d_2d(x, gamma, beta, row_block)
    if x.ndim == 3:
        return _bn1d_3d(x, gamma, beta, row_block)
    raise ValueError("BatchNorm1d expects 2D (N, C) or 3D (N, C, L) input")


class SwitchBatchNorm1d:
    """JAX/Pallas port of models.quan_ops.SwitchBatchNorm1d (forward only)."""

    def __init__(self, num_features, bit_list, key):
        self.bit_list = list(bit_list)
        self.abit = self.bit_list[-1]
        self.wbit = self.bit_list[-1]
        if self.abit != self.wbit:
            raise ValueError("Currenty only support same activation and weight bit width!")
        # One BatchNorm1d parameter set per bit-width.  PyTorch default init is
        # weight=1, bias=0; perturb deterministically so the affine path is
        # actually exercised.
        self.bn_params = {}
        for i, bit in enumerate(self.bit_list):
            kg, kb = jax.random.split(jax.random.fold_in(key, i))
            gamma = 1.0 + 0.1 * jax.random.normal(kg, (num_features,), jnp.float32)
            beta = 0.1 * jax.random.normal(kb, (num_features,), jnp.float32)
            self.bn_params[str(bit)] = (gamma, beta)
        # TODO(synk): running_mean/running_var updates are an in-place training
        # side effect of nn.BatchNorm1d that does not affect the returned
        # output; they are not materialized here.

    def __call__(self, x, row_block=None):
        gamma, beta = self.bn_params[str(self.abit)]
        return batchnorm1d_train(x, gamma, beta, row_block=row_block)


# --------------------------------------------------------------------------
# References + self-test
# --------------------------------------------------------------------------
def _reference_2d(x, gamma, beta):
    x32 = x.astype(jnp.float32)
    mean = jnp.mean(x32, axis=0, keepdims=True)
    var = jnp.mean((x32 - mean) ** 2, axis=0, keepdims=True)
    y = (x32 - mean) * lax.rsqrt(var + EPS) * gamma[None, :] + beta[None, :]
    return y.astype(x.dtype)


def _reference_3d(x, gamma, beta):
    x32 = x.astype(jnp.float32)
    mean = jnp.mean(x32, axis=(0, 2), keepdims=True)
    var = jnp.mean((x32 - mean) ** 2, axis=(0, 2), keepdims=True)
    y = ((x32 - mean) * lax.rsqrt(var + EPS)
         * gamma[None, :, None] + beta[None, :, None])
    return y.astype(x.dtype)


if __name__ == "__main__":
    key = jax.random.PRNGKey(0)
    k_a, k_b, k_c, k_d, k_e, k_f, k_p = jax.random.split(key, 7)

    num_features = 32
    module = SwitchBatchNorm1d(num_features, [2, 4, 8], k_p)
    gamma, beta = module.bn_params[str(module.abit)]
    ATOL = RTOL = 2e-4

    # 2-D fast path (whole tensor VMEM-resident, single pass).
    x_a = jax.random.normal(k_a, (64, num_features), jnp.float32) * 2.0 + 1.5
    out_a = jax.block_until_ready(module(x_a))
    assert out_a.shape == x_a.shape and out_a.dtype == x_a.dtype
    assert jnp.allclose(out_a, _reference_2d(x_a, gamma, beta),
                        atol=ATOL, rtol=RTOL), "2D fast-path mismatch"

    # 2-D streaming path: lane packing (k*C multiple of 128) + ragged row tile.
    x_b = jax.random.normal(k_b, (200, num_features), jnp.float32) + 3.0
    out_b = jax.block_until_ready(module(x_b, row_block=8))
    assert jnp.allclose(out_b, _reference_2d(x_b, gamma, beta),
                        atol=ATOL, rtol=RTOL), "2D streaming (packed) mismatch"

    # 2-D streaming path, prime row count -> no packing, unaligned lanes + ragged tile.
    x_c = jax.random.normal(k_c, (37, num_features), jnp.float32)
    out_c = jax.block_until_ready(module(x_c, row_block=8))
    assert jnp.allclose(out_c, _reference_2d(x_c, gamma, beta),
                        atol=ATOL, rtol=RTOL), "2D streaming (unpacked) mismatch"

    # 3-D fast path in native (N, C, L) layout.
    x_d = jax.random.normal(k_d, (4, num_features, 24), jnp.float32)
    out_d = jax.block_until_ready(module(x_d))
    assert out_d.shape == x_d.shape and out_d.dtype == x_d.dtype
    assert jnp.allclose(out_d, _reference_3d(x_d, gamma, beta),
                        atol=ATOL, rtol=RTOL), "3D fast-path mismatch"

    # 3-D streaming path with ragged N and ragged (128-tiled) L.
    x_e = jax.random.normal(k_e, (3, num_features, 300), jnp.float32) - 2.0
    out_e = jax.block_until_ready(module(x_e, row_block=2))
    assert jnp.allclose(out_e, _reference_3d(x_e, gamma, beta),
                        atol=ATOL, rtol=RTOL), "3D streaming (ragged L) mismatch"

    # 3-D streaming path with small full-extent L and ragged N.
    x_f = jax.random.normal(k_f, (7, num_features, 24), jnp.float32)
    out_f = jax.block_until_ready(module(x_f, row_block=2))
    assert jnp.allclose(out_f, _reference_3d(x_f, gamma, beta),
                        atol=ATOL, rtol=RTOL), "3D streaming (ragged N) mismatch"

    print("KERNEL_OK")
</pallas_src>

<mosaic_0001>
module attributes {stable_mosaic.version = 11 : i64} {
  func.func @_single_pass_2d_kernel(%arg0: i32, %arg1: memref<64x32xf32, #tpu.memory_space<vmem>>, %arg2: memref<1x32xf32, #tpu.memory_space<vmem>>, %arg3: memref<1x32xf32, #tpu.memory_space<vmem>>, %arg4: memref<64x32xf32, #tpu.memory_space<vmem>>) attributes {dimension_semantics = [#tpu.dimension_semantics<arbitrary>], iteration_bounds = array<i64: 1>, scalar_prefetch = 0 : i64, scratch_operands = 0 : i64, tpu.core_type = #tpu.core_type<tc>, window_params = [{pipeline_mode = #tpu.pipeline_mode<synchronous>, transform_indices = @transform_0, window_bounds = array<i64: 64, 32>}, {pipeline_mode = #tpu.pipeline_mode<synchronous>, transform_indices = @transform_1, window_bounds = array<i64: 1, 32>}, {pipeline_mode = #tpu.pipeline_mode<synchronous>, transform_indices = @transform_2, window_bounds = array<i64: 1, 32>}, {pipeline_mode = #tpu.pipeline_mode<synchronous>, transform_indices = @transform_3, window_bounds = array<i64: 64, 32>}]} {
    %c0 = arith.constant 0 : index
    %c0_0 = arith.constant 0 : index
    %0 = vector.load %arg1[%c0, %c0_0] : memref<64x32xf32, #tpu.memory_space<vmem>>, vector<64x32xf32>
    %cst = arith.constant dense<0.000000e+00> : vector<32xf32>
    %1 = vector.multi_reduction <add>, %0, %cst [0] : vector<64x32xf32> to vector<32xf32>
    %2 = vector.shape_cast %1 : vector<32xf32> to vector<1x32xf32>
    %cst_1 = arith.constant 1.562500e-02 : f32
    %3 = vector.broadcast %cst_1 : f32 to vector<1x32xf32>
    %4 = arith.mulf %2, %3 : vector<1x32xf32>
    %5 = vector.broadcast %4 : vector<1x32xf32> to vector<64x32xf32>
    %6 = arith.subf %0, %5 : vector<64x32xf32>
    %7 = arith.mulf %6, %6 : vector<64x32xf32>
    %cst_2 = arith.constant dense<0.000000e+00> : vector<32xf32>
    %8 = vector.multi_reduction <add>, %7, %cst_2 [0] : vector<64x32xf32> to vector<32xf32>
    %9 = vector.shape_cast %8 : vector<32xf32> to vector<1x32xf32>
    %cst_3 = arith.constant 1.562500e-02 : f32
    %10 = vector.broadcast %cst_3 : f32 to vector<1x32xf32>
    %11 = arith.mulf %9, %10 : vector<1x32xf32>
    %c0_4 = arith.constant 0 : index
    %c0_5 = arith.constant 0 : index
    %12 = vector.load %arg2[%c0_4, %c0_5] : memref<1x32xf32, #tpu.memory_space<vmem>>, vector<1x32xf32>
    %cst_6 = arith.constant 9.99999974E-6 : f32
    %13 = vector.broadcast %cst_6 : f32 to vector<1x32xf32>
    %14 = arith.addf %11, %13 : vector<1x32xf32>
    %15 = math.rsqrt %14 : vector<1x32xf32>
    %16 = arith.mulf %12, %15 : vector<1x32xf32>
    %17 = vector.broadcast %16 : vector<1x32xf32> to vector<64x32xf32>
    %18 = arith.mulf %6, %17 : vector<64x32xf32>
    %c0_7 = arith.constant 0 : index
    %c0_8 = arith.constant 0 : index
    %19 = vector.load %arg3[%c0_7, %c0_8] : memref<1x32xf32, #tpu.memory_space<vmem>>, vector<1x32xf32>
    %20 = vector.broadcast %19 : vector<1x32xf32> to vector<64x32xf32>
    %21 = arith.addf %18, %20 : vector<64x32xf32>
    %c0_9 = arith.constant 0 : index
    %c0_10 = arith.constant 0 : index
    %22 = vector.load %arg4[%c0_9, %c0_10] : memref<64x32xf32, #tpu.memory_space<vmem>>, vector<64x32xf32>
    tpu.vector_store %arg4[%c0_9, %c0_10], %21 {strides = array<i32>} : memref<64x32xf32, #tpu.memory_space<vmem>>, vector<64x32xf32>,
    return
  }
  func.func @transform_0(%arg0: i32) -> (i32, i32) {
    %c0_i32 = arith.constant 0 : i32
    %c0_i32_0 = arith.constant 0 : i32
    %c0_i32_1 = arith.constant 0 : i32
    return %c0_i32, %c0_i32_0 : i32, i32
  }
  func.func @transform_1(%arg0: i32) -> (i32, i32) {
    %c0_i32 = arith.constant 0 : i32
    %c0_i32_0 = arith.constant 0 : i32
    %c0_i32_1 = arith.constant 0 : i32
    return %c0_i32, %c0_i32_0 : i32, i32
  }
  func.func @transform_2(%arg0: i32) -> (i32, i32) {
    %c0_i32 = arith.constant 0 : i32
    %c0_i32_0 = arith.constant 0 : i32
    %c0_i32_1 = arith.constant 0 : i32
    return %c0_i32, %c0_i32_0 : i32, i32
  }
  func.func @transform_3(%arg0: i32) -> (i32, i32) {
    %c0_i32 = arith.constant 0 : i32
    %c0_i32_0 = arith.constant 0 : i32
    %c0_i32_1 = arith.constant 0 : i32
    return %c0_i32, %c0_i32_0 : i32, i32
  }
}

</mosaic_0001>

<llo_original>
// kernel: tpu_custom_call.1
$region0: #{tpu_custom_call.1}
  #allocation0 [shape = 'u32[]', space=smem, size = 0x4, offset = 0x4, fixed_abs, tag = 'smem constant byte address 0x4 - core index']
  #allocation1 [shape = 'u32[144,128]{1,0:T(1,128)}', space=vmem, size = 0x12000, scoped, tag = 'internal scratch']
  %s0 = inlined_call_operand.vmem [shape: f32[64,32], index: 0, kind: input, shape index: {}]
  %s1 = inlined_call_operand.vmem [shape: f32[1,32], index: 1, kind: input, shape index: {}]
  %s2 = inlined_call_operand.vmem [shape: f32[1,32], index: 2, kind: input, shape index: {}]
  %s3 = inlined_call_operand.vmem [shape: f32[64,32], index: 3, kind: output, shape index: {}]
  %s4 = sld [smem:[#allocation0]]
  $region22: #{tpu_custom_call.1} parent=0
    _
  %s6 = ssub.s32 1, %s4
  %s7 = scalar_select 0, %s6, %s4
  // Predicated region
  $region2: #{tpu_custom_call.1} parent=0 // pred_check
    _
  $region3: #{tpu_custom_call.1} parent=0 // pred_check_branch
    %9 = sbr.rel (0) target = $region5
  $region4: #{tpu_custom_call.1} parent=0 // pred_region
    _
  $region5: #{tpu_custom_call.1} parent=0 // pred_fallthru
    _
  // Predicated region
  $region6: #{tpu_custom_call.1} parent=0 // pred_check
    _
  $region7: #{tpu_custom_call.1} parent=0 // pred_check_branch
    %11 = sbr.rel (0) target = $region9
  $region8: #{tpu_custom_call.1} parent=0 // pred_region
    _
  $region9: #{tpu_custom_call.1} parent=0 // pred_fallthru
    _
  // Predicated region
  $region10: #{tpu_custom_call.1} parent=0 // pred_check
    _
  $region11: #{tpu_custom_call.1} parent=0 // pred_check_branch
    %13 = sbr.rel (0) target = $region13
  $region12: #{tpu_custom_call.1} parent=0 // pred_region
    _
  $region13: #{tpu_custom_call.1} parent=0 // pred_fallthru
    _
  %v14 = vld [vmem:[%s0] sm:$0xff]
  %v15 = vld [vmem:[%s0 + $0x8] sm:$0xff]
  %v16 = vld [vmem:[%s0 + $0x10] sm:$0xff]
  %v17 = vld [vmem:[%s0 + $0x18] sm:$0xff]
  %v18 = vld [vmem:[%s0 + $0x20] sm:$0xff]
  %v19 = vld [vmem:[%s0 + $0x28] sm:$0xff]
  %v20 = vld [vmem:[%s0 + $0x30] sm:$0xff]
  %v21 = vld [vmem:[%s0 + $0x38] sm:$0xff]
  %vm22 = vcmask 261120
  %v23 = vsel %vm22, %v14, 0.0
  %v24 = vsel %vm22, %v15, 0.0
  %v25 = vadd.f32 %v23, %v24
  %v26 = vsel %vm22, %v16, 0.0
  %v27 = vadd.f32 %v25, %v26
  %v28 = vsel %vm22, %v17, 0.0
  %v29 = vadd.f32 %v27, %v28
  %v30 = vsel %vm22, %v18, 0.0
  %v31 = vadd.f32 %v29, %v30
  %v32 = vsel %vm22, %v19, 0.0
  %v33 = vadd.f32 %v31, %v32
  %v34 = vsel %vm22, %v20, 0.0
  %v35 = vadd.f32 %v33, %v34
  %v36 = vsel %vm22, %v21, 0.0
  %v37 = vadd.f32 %v35, %v36
  %v38 = vrot.slane %v37, 4
  %v39 = vadd.f32 %v37, %v38
  %v40 = vrot.slane %v39, 2
  %v41 = vadd.f32 %v39, %v40
  %v42 = vrot.slane %v41, 1
  %v43 = vadd.f32 %v41, %v42
  %v44 = vmul.f32 %v43, 0.015625
  %v45 = vsub.f32 %v14, %v44
  %v46 = vsub.f32 %v15, %v44
  %v47 = vsub.f32 %v16, %v44
  %v48 = vsub.f32 %v17, %v44
  %v49 = vsub.f32 %v18, %v44
  %v50 = vsub.f32 %v19, %v44
  %v51 = vsub.f32 %v20, %v44
  %v52 = vsub.f32 %v21, %v44
  %v53 = vmul.f32 %v45, %v45
  %v54 = vmul.f32 %v46, %v46
  %v55 = vmul.f32 %v47, %v47
  %v56 = vmul.f32 %v48, %v48
  %v57 = vmul.f32 %v49, %v49
  %v58 = vmul.f32 %v50, %v50
  %v59 = vmul.f32 %v51, %v51
  %v60 = vmul.f32 %v52, %v52
  %v61 = vsel %vm22, %v53, 0.0
  %v62 = vsel %vm22, %v54, 0.0
  %v63 = vadd.f32 %v61, %v62
  %v64 = vsel %vm22, %v55, 0.0
  %v65 = vadd.f32 %v63, %v64
  %v66 = vsel %vm22, %v56, 0.0
  %v67 = vadd.f32 %v65, %v66
  %v68 = vsel %vm22, %v57, 0.0
  %v69 = vadd.f32 %v67, %v68
  %v70 = vsel %vm22, %v58, 0.0
  %v71 = vadd.f32 %v69, %v70
  %v72 = vsel %vm22, %v59, 0.0
  %v73 = vadd.f32 %v71, %v72
  %v74 = vsel %vm22, %v60, 0.0
  %v75 = vadd.f32 %v73, %v74
  %v76 = vrot.slane %v75, 4
  %v77 = vadd.f32 %v75, %v76
  %v78 = vrot.slane %v77, 2
  %v79 = vadd.f32 %v77, %v78
  %v80 = vrot.slane %v79, 1
  %v81 = vadd.f32 %v79, %v80
  %v82 = vmul.f32 %v81, 0.015625
  %v83 = vld [vmem:[%s1] sm:$0x1]
  %v84 = vadd.f32 %v82, 1e-05
  %v85 = vrsqrt.pop %v84
  %v86 = vmul.f32 %v83, %v85
  %v88 = vlaneseq
  %v89 = vshrl.u32 %v88, 7
  %v90 = vsub.s32 0, %v89
  %v91 = vrot.slane %v86, %v90
  %v93 = vmul.f32 %v45, %v91
  %v94 = vmul.f32 %v46, %v91
  %v95 = vmul.f32 %v47, %v91
  %v96 = vmul.f32 %v48, %v91
  %v97 = vmul.f32 %v49, %v91
  %v98 = vmul.f32 %v50, %v91
  %v99 = vmul.f32 %v51, %v91
  %v100 = vmul.f32 %v52, %v91
  %v101 = vld [vmem:[%s2] sm:$0x1]
  %v103 = vlaneseq
  %v104 = vshrl.u32 %v103, 7
  %v105 = vsub.s32 0, %v104
  %v106 = vrot.slane %v101, %v105
  %v108 = vadd.f32 %v93, %v106
  %v109 = vadd.f32 %v94, %v106
  %v110 = vadd.f32 %v95, %v106
  %v111 = vadd.f32 %v96, %v106
  %v112 = vadd.f32 %v97, %v106
  %v113 = vadd.f32 %v98, %v106
  %v114 = vadd.f32 %v99, %v106
  %v115 = vadd.f32 %v100, %v106
  %116 = vst.msk [vmem:[%s3] sm:$0xff] %vm22, %v108
  %117 = vst.msk [vmem:[%s3 + $0x8] sm:$0xff] %vm22, %v109
  %118 = vst.msk [vmem:[%s3 + $0x10] sm:$0xff] %vm22, %v110
  %119 = vst.msk [vmem:[%s3 + $0x18] sm:$0xff] %vm22, %v111
  %120 = vst.msk [vmem:[%s3 + $0x20] sm:$0xff] %vm22, %v112
  %121 = vst.msk [vmem:[%s3 + $0x28] sm:$0xff] %vm22, %v113
  %122 = vst.msk [vmem:[%s3 + $0x30] sm:$0xff] %vm22, %v114
  %123 = vst.msk [vmem:[%s3 + $0x38] sm:$0xff] %vm22, %v115
  // Predicated region
  $region14: #{tpu_custom_call.1} parent=0 // pred_check
    _
  $region15: #{tpu_custom_call.1} parent=0 // pred_check_branch
    %125 = sbr.rel (0) target = $region17
  $region16: #{tpu_custom_call.1} parent=0 // pred_region
    _
  $region17: #{tpu_custom_call.1} parent=0 // pred_fallthru
    _
  // Predicated region
  $region18: #{tpu_custom_call.1} parent=0 // pred_check
    _
  $region19: #{tpu_custom_call.1} parent=0 // pred_check_branch
    %127 = sbr.rel (0) target = $region21
  $region20: #{tpu_custom_call.1} parent=0 // pred_region
    _
  $region21: #{tpu_custom_call.1} parent=0 // pred_fallthru
    _

</llo_original>
